<compile_context>
chip_gen: v6e
topology: v6e:2x2x1
jax: 0.10.0
libtpu: 0.0.40
codegen_flags: <defaults>
</compile_context>

<pallas_src>
import functools

import jax
import jax.numpy as jnp
from jax import lax
from jax.experimental import pallas as pl
from jax.experimental.pallas import tpu as pltpu

_HP = 128        # padded hidden width (was 64)
_AP = 128        # padded action lane width
_NEG_BIG = -1e30  # finite "minus infinity" for lane masking


def _policy_mlp_kernel(
    x_ref,
    w1_ref, b1_ref,
    w2_ref, b2_ref,
    w3_ref, b3_ref,
    w4_ref, b4_ref,
    logits_ref, probs_ref,
    *, action_dim,
):
    f32 = jnp.float32

    def dense(h, w_ref, b_ref):
        # Matmul inputs in the weight dtype (f32 or bf16); accumulate + bias in f32.
        return jnp.dot(h.astype(w_ref.dtype), w_ref[...],
                       preferred_element_type=f32) + b_ref[...]

    h = jnp.maximum(dense(x_ref[...], w1_ref, b1_ref), 0.0)
    h = jnp.maximum(dense(h, w2_ref, b2_ref), 0.0)
    h = jnp.maximum(dense(h, w3_ref, b3_ref), 0.0)
    logits = dense(h, w4_ref, b4_ref)                  # [tm, 128] (lanes >= action_dim are 0)
    logits_ref[...] = logits.astype(logits_ref.dtype)

    # Categorical(logits) -> softmax over the *valid* action lanes only.
    lane = lax.broadcasted_iota(jnp.int32, logits.shape, dimension=1)
    valid = lane < action_dim
    masked = jnp.where(valid, logits, _NEG_BIG)
    m = jnp.max(masked, axis=-1, keepdims=True)
    e = jnp.exp(masked - m)                            # padded lanes underflow to 0
    denom = jnp.sum(e, axis=-1, keepdims=True)
    # Exact division: softmax cost is negligible next to the matmuls, and the
    # approx (EUP) reciprocal was not accurate enough for sum(probs)==1.
    probs_ref[...] = (e / denom).astype(probs_ref.dtype)


def _pad2(a, rows, cols):
    out = jnp.zeros((rows, cols), jnp.float32)
    return out.at[: a.shape[0], : a.shape[1]].set(a.astype(jnp.float32))


@functools.partial(jax.jit, static_argnames=("matmul_dtype", "tm"))
def policy_network_forward(x, params, *, matmul_dtype=jnp.float32, tm=None):
    """PolicyNetwork forward pass as a single batch-tiled Pallas kernel.

    Args:
      x:       [B, state_dim] float32 states.
      params:  dict with w1..w4 ([in, out]) and b1..b4 ([1, out]) float32.
      matmul_dtype: dtype fed to the MXU (jnp.float32 or jnp.bfloat16).
      tm:      batch tile rows (default: 512 for large B, else B rounded up to 8).

    Returns:
      (logits, probs): [B, action_dim] each — the Categorical distribution.
    """
    B, state_dim = x.shape
    action_dim = params["w4"].shape[1]

    # --- operand preprocessing: lane-dense (128-padded) weights/biases -------
    w1 = _pad2(params["w1"], state_dim, _HP).astype(matmul_dtype)
    w2 = _pad2(params["w2"], _HP, _HP).astype(matmul_dtype)
    w3 = _pad2(params["w3"], _HP, _HP).astype(matmul_dtype)
    w4 = _pad2(params["w4"], _HP, _AP).astype(matmul_dtype)
    b1 = _pad2(params["b1"], 1, _HP)
    b2 = _pad2(params["b2"], 1, _HP)
    b3 = _pad2(params["b3"], 1, _HP)
    b4 = _pad2(params["b4"], 1, _AP)

    # --- batch tiling (this workload is ~1 KB/row; tiles are VMEM-cheap) -----
    if tm is None:
        tm = 512 if B >= 512 else max(8, ((B + 7) // 8) * 8)
    tm = ((tm + 7) // 8) * 8
    n_blocks = pl.cdiv(B, tm)
    b_pad = n_blocks * tm
    x_p = jnp.zeros((b_pad, state_dim), jnp.float32).at[:B].set(x).astype(matmul_dtype)

    const = lambda i: (0, 0)          # resident weights/biases: DMA'd once
    tiled = lambda i: (i, 0)          # batch-tiled x / outputs

    in_specs = [
        pl.BlockSpec((tm, state_dim), tiled),
        pl.BlockSpec((state_dim, _HP), const), pl.BlockSpec((1, _HP), const),
        pl.BlockSpec((_HP, _HP), const),       pl.BlockSpec((1, _HP), const),
        pl.BlockSpec((_HP, _HP), const),       pl.BlockSpec((1, _HP), const),
        pl.BlockSpec((_HP, _AP), const),       pl.BlockSpec((1, _AP), const),
    ]
    out_specs = (
        pl.BlockSpec((tm, _AP), tiled),
        pl.BlockSpec((tm, _AP), tiled),
    )

    itemsize = jnp.dtype(matmul_dtype).itemsize
    weight_bytes = (
        (state_dim * _HP + 2 * _HP * _HP + _HP * _AP) * itemsize
        + (3 * _HP + _AP) * 4
    )
    cost = pl.CostEstimate(
        flops=2 * b_pad * (state_dim * _HP + 2 * _HP * _HP + _HP * _AP),
        transcendentals=b_pad * _AP,
        bytes_accessed=b_pad * state_dim * itemsize + weight_bytes + 2 * b_pad * _AP * 4,
    )

    logits_pad, probs_pad = pl.pallas_call(
        functools.partial(_policy_mlp_kernel, action_dim=action_dim),
        out_shape=(
            jax.ShapeDtypeStruct((b_pad, _AP), jnp.float32),
            jax.ShapeDtypeStruct((b_pad, _AP), jnp.float32),
        ),
        grid=(n_blocks,),
        in_specs=in_specs,
        out_specs=out_specs,
        compiler_params=pltpu.CompilerParams(
            dimension_semantics=("parallel",),
        ),
        cost_estimate=cost,
    )(x_p, w1, b1, w2, b2, w3, b3, w4, b4)

    return logits_pad[:B, :action_dim], probs_pad[:B, :action_dim]


def init_params(key, state_dim, action_dim, hidden=64):
    """Deterministic init mimicking nn.Linear (uniform +/-1/sqrt(fan_in))."""
    dims = [(state_dim, hidden), (hidden, hidden), (hidden, hidden), (hidden, action_dim)]
    params = {}
    for i, (fan_in, fan_out) in enumerate(dims, start=1):
        key, kw, kb = jax.random.split(key, 3)
        bound = 1.0 / jnp.sqrt(jnp.float32(fan_in))
        params[f"w{i}"] = jax.random.uniform(
            kw, (fan_in, fan_out), jnp.float32, -bound, bound
        )
        params[f"b{i}"] = jax.random.uniform(
            kb, (1, fan_out), jnp.float32, -bound, bound
        )
    return params


if __name__ == "__main__":
    key = jax.random.PRNGKey(0)
    k_params, k_x = jax.random.split(key)

    state_dim, action_dim, batch = 8, 4, 8
    params = init_params(k_params, state_dim, action_dim)
    x = jax.random.normal(k_x, (batch, state_dim), jnp.float32)

    logits, probs = policy_network_forward(x, params)
    jax.block_until_ready((logits, probs))

    # Pure-JAX reference check (f32 path).
    def ref(x, p):
        h = jnp.maximum(x @ p["w1"] + p["b1"], 0.0)
        h = jnp.maximum(h @ p["w2"] + p["b2"], 0.0)
        h = jnp.maximum(h @ p["w3"] + p["b3"], 0.0)
        lg = h @ p["w4"] + p["b4"]
        return lg, jax.nn.softmax(lg, axis=-1)

    ref_logits, ref_probs = ref(x, params)
    assert logits.shape == (batch, action_dim) and probs.shape == (batch, action_dim)
    assert jnp.allclose(logits, ref_logits, atol=1e-4, rtol=1e-4)
    assert jnp.allclose(probs, ref_probs, atol=1e-4, rtol=1e-4)
    assert jnp.allclose(jnp.sum(probs, axis=-1), 1.0, atol=1e-4)

    # bf16-matmul path (v6e/v7x fast path): must run clean and produce a valid
    # distribution; elementwise math stays f32 inside the kernel.
    logits_bf, probs_bf = policy_network_forward(x, params, matmul_dtype=jnp.bfloat16)
    jax.block_until_ready((logits_bf, probs_bf))
    assert jnp.all(jnp.isfinite(logits_bf)) and jnp.all(jnp.isfinite(probs_bf))
    assert jnp.allclose(jnp.sum(probs_bf, axis=-1), 1.0, atol=1e-3)

    print("KERNEL_OK")
</pallas_src>

<mosaic_0001>
module attributes {stable_mosaic.version = 11 : i64} {
  func.func @_policy_mlp_kernel(%arg0: i32, %arg1: memref<8x8xf32, #tpu.memory_space<vmem>>, %arg2: memref<8x128xf32, #tpu.memory_space<vmem>>, %arg3: memref<1x128xf32, #tpu.memory_space<vmem>>, %arg4: memref<128x128xf32, #tpu.memory_space<vmem>>, %arg5: memref<1x128xf32, #tpu.memory_space<vmem>>, %arg6: memref<128x128xf32, #tpu.memory_space<vmem>>, %arg7: memref<1x128xf32, #tpu.memory_space<vmem>>, %arg8: memref<128x128xf32, #tpu.memory_space<vmem>>, %arg9: memref<1x128xf32, #tpu.memory_space<vmem>>, %arg10: memref<8x128xf32, #tpu.memory_space<vmem>>, %arg11: memref<8x128xf32, #tpu.memory_space<vmem>>) attributes {dimension_semantics = [#tpu.dimension_semantics<parallel>], iteration_bounds = array<i64: 1>, scalar_prefetch = 0 : i64, scratch_operands = 0 : i64, tpu.core_type = #tpu.core_type<tc>, window_params = [{transform_indices = @transform_0, window_bounds = array<i64: 8, 8>}, {pipeline_mode = #tpu.pipeline_mode<synchronous>, transform_indices = @transform_1, window_bounds = array<i64: 8, 128>}, {pipeline_mode = #tpu.pipeline_mode<synchronous>, transform_indices = @transform_2, window_bounds = array<i64: 1, 128>}, {pipeline_mode = #tpu.pipeline_mode<synchronous>, transform_indices = @transform_3, window_bounds = array<i64: 128, 128>}, {pipeline_mode = #tpu.pipeline_mode<synchronous>, transform_indices = @transform_4, window_bounds = array<i64: 1, 128>}, {pipeline_mode = #tpu.pipeline_mode<synchronous>, transform_indices = @transform_5, window_bounds = array<i64: 128, 128>}, {pipeline_mode = #tpu.pipeline_mode<synchronous>, transform_indices = @transform_6, window_bounds = array<i64: 1, 128>}, {pipeline_mode = #tpu.pipeline_mode<synchronous>, transform_indices = @transform_7, window_bounds = array<i64: 128, 128>}, {pipeline_mode = #tpu.pipeline_mode<synchronous>, transform_indices = @transform_8, window_bounds = array<i64: 1, 128>}, {transform_indices = @transform_9, window_bounds = array<i64: 8, 128>}, {transform_indices = @transform_10, window_bounds = array<i64: 8, 128>}]} {
    %c0 = arith.constant 0 : index
    %c0_0 = arith.constant 0 : index
    %0 = vector.load %arg1[%c0, %c0_0] : memref<8x8xf32, #tpu.memory_space<vmem>>, vector<8x8xf32>
    %c0_1 = arith.constant 0 : index
    %c0_2 = arith.constant 0 : index
    %1 = vector.load %arg2[%c0_1, %c0_2] : memref<8x128xf32, #tpu.memory_space<vmem>>, vector<8x128xf32>
    %cst = arith.constant dense<0.000000e+00> : vector<8x128xf32>
    %2 = tpu.matmul %0, %1, %cst {dimension_numbers = #tpu.dot_dimension_numbers<[1], [0], [0], [1], [0, 0, 1, 1], [], []>} : vector<8x8xf32>, vector<8x128xf32>, vector<8x128xf32> -> vector<8x128xf32>
    %c0_3 = arith.constant 0 : index
    %c0_4 = arith.constant 0 : index
    %3 = vector.load %arg3[%c0_3, %c0_4] : memref<1x128xf32, #tpu.memory_space<vmem>>, vector<1x128xf32>
    %4 = vector.broadcast %3 : vector<1x128xf32> to vector<8x128xf32>
    %5 = arith.addf %2, %4 : vector<8x128xf32>
    %cst_5 = arith.constant 0.000000e+00 : f32
    %6 = vector.broadcast %cst_5 : f32 to vector<8x128xf32>
    %7 = arith.maximumf %5, %6 : vector<8x128xf32>
    %c0_6 = arith.constant 0 : index
    %c0_7 = arith.constant 0 : index
    %8 = vector.load %arg4[%c0_6, %c0_7] : memref<128x128xf32, #tpu.memory_space<vmem>>, vector<128x128xf32>
    %cst_8 = arith.constant dense<0.000000e+00> : vector<8x128xf32>
    %9 = tpu.matmul %7, %8, %cst_8 {dimension_numbers = #tpu.dot_dimension_numbers<[1], [0], [0], [1], [0, 0, 1, 1], [], []>} : vector<8x128xf32>, vector<128x128xf32>, vector<8x128xf32> -> vector<8x128xf32>
    %c0_9 = arith.constant 0 : index
    %c0_10 = arith.constant 0 : index
    %10 = vector.load %arg5[%c0_9, %c0_10] : memref<1x128xf32, #tpu.memory_space<vmem>>, vector<1x128xf32>
    %11 = vector.broadcast %10 : vector<1x128xf32> to vector<8x128xf32>
    %12 = arith.addf %9, %11 : vector<8x128xf32>
    %cst_11 = arith.constant 0.000000e+00 : f32
    %13 = vector.broadcast %cst_11 : f32 to vector<8x128xf32>
    %14 = arith.maximumf %12, %13 : vector<8x128xf32>
    %c0_12 = arith.constant 0 : index
    %c0_13 = arith.constant 0 : index
    %15 = vector.load %arg6[%c0_12, %c0_13] : memref<128x128xf32, #tpu.memory_space<vmem>>, vector<128x128xf32>
    %cst_14 = arith.constant dense<0.000000e+00> : vector<8x128xf32>
    %16 = tpu.matmul %14, %15, %cst_14 {dimension_numbers = #tpu.dot_dimension_numbers<[1], [0], [0], [1], [0, 0, 1, 1], [], []>} : vector<8x128xf32>, vector<128x128xf32>, vector<8x128xf32> -> vector<8x128xf32>
    %c0_15 = arith.constant 0 : index
    %c0_16 = arith.constant 0 : index
    %17 = vector.load %arg7[%c0_15, %c0_16] : memref<1x128xf32, #tpu.memory_space<vmem>>, vector<1x128xf32>
    %18 = vector.broadcast %17 : vector<1x128xf32> to vector<8x128xf32>
    %19 = arith.addf %16, %18 : vector<8x128xf32>
    %cst_17 = arith.constant 0.000000e+00 : f32
    %20 = vector.broadcast %cst_17 : f32 to vector<8x128xf32>
    %21 = arith.maximumf %19, %20 : vector<8x128xf32>
    %c0_18 = arith.constant 0 : index
    %c0_19 = arith.constant 0 : index
    %22 = vector.load %arg8[%c0_18, %c0_19] : memref<128x128xf32, #tpu.memory_space<vmem>>, vector<128x128xf32>
    %cst_20 = arith.constant dense<0.000000e+00> : vector<8x128xf32>
    %23 = tpu.matmul %21, %22, %cst_20 {dimension_numbers = #tpu.dot_dimension_numbers<[1], [0], [0], [1], [0, 0, 1, 1], [], []>} : vector<8x128xf32>, vector<128x128xf32>, vector<8x128xf32> -> vector<8x128xf32>
    %c0_21 = arith.constant 0 : index
    %c0_22 = arith.constant 0 : index
    %24 = vector.load %arg9[%c0_21, %c0_22] : memref<1x128xf32, #tpu.memory_space<vmem>>, vector<1x128xf32>
    %25 = vector.broadcast %24 : vector<1x128xf32> to vector<8x128xf32>
    %26 = arith.addf %23, %25 : vector<8x128xf32>
    %c0_23 = arith.constant 0 : index
    %c0_24 = arith.constant 0 : index
    %27 = vector.load %arg10[%c0_23, %c0_24] : memref<8x128xf32, #tpu.memory_space<vmem>>, vector<8x128xf32>
    tpu.vector_store %arg10[%c0_23, %c0_24], %26 {strides = array<i32>} : memref<8x128xf32, #tpu.memory_space<vmem>>, vector<8x128xf32>,
    %28 = tpu.iota {dimensions = array<i32: 1>} : vector<8x128xi32>
    %c4_i32 = arith.constant 4 : i32
    %29 = vector.broadcast %c4_i32 : i32 to vector<8x128xi32>
    %30 = arith.cmpi slt, %28, %29 : vector<8x128xi32>
    %cst_25 = arith.constant -1.000000e+30 : f32
    %31 = vector.broadcast %cst_25 : f32 to vector<8x128xf32>
    %32 = arith.select %30, %26, %31 : vector<8x128xi1>, vector<8x128xf32>
    %cst_26 = arith.constant dense<0xFF800000> : vector<8xf32>
    %33 = vector.multi_reduction <maximumf>, %32, %cst_26 [1] : vector<8x128xf32> to vector<8xf32>
    %34 = vector.shape_cast %33 : vector<8xf32> to vector<8x1xf32>
    %35 = vector.broadcast %34 : vector<8x1xf32> to vector<8x128xf32>
    %36 = arith.subf %32, %35 : vector<8x128xf32>
    %37 = math.exp %36 : vector<8x128xf32>
    %cst_27 = arith.constant dense<0.000000e+00> : vector<8xf32>
    %38 = vector.multi_reduction <add>, %37, %cst_27 [1] : vector<8x128xf32> to vector<8xf32>
    %39 = vector.shape_cast %38 : vector<8xf32> to vector<8x1xf32>
    %40 = vector.broadcast %39 : vector<8x1xf32> to vector<8x128xf32>
    %41 = arith.divf %37, %40 : vector<8x128xf32>
    %c0_28 = arith.constant 0 : index
    %c0_29 = arith.constant 0 : index
    %42 = vector.load %arg11[%c0_28, %c0_29] : memref<8x128xf32, #tpu.memory_space<vmem>>, vector<8x128xf32>
    tpu.vector_store %arg11[%c0_28, %c0_29], %41 {strides = array<i32>} : memref<8x128xf32, #tpu.memory_space<vmem>>, vector<8x128xf32>,
    return
  }
  func.func @transform_0(%arg0: i32) -> (i32, i32) {
    %c0_i32 = arith.constant 0 : i32
    %c0_i32_0 = arith.constant 0 : i32
    return %arg0, %c0_i32 : i32, i32
  }
  func.func @transform_1(%arg0: i32) -> (i32, i32) {
    %c0_i32 = arith.constant 0 : i32
    %c0_i32_0 = arith.constant 0 : i32
    %c0_i32_1 = arith.constant 0 : i32
    return %c0_i32, %c0_i32_0 : i32, i32
  }
  func.func @transform_2(%arg0: i32) -> (i32, i32) {
    %c0_i32 = arith.constant 0 : i32
    %c0_i32_0 = arith.constant 0 : i32
    %c0_i32_1 = arith.constant 0 : i32
    return %c0_i32, %c0_i32_0 : i32, i32
  }
  func.func @transform_3(%arg0: i32) -> (i32, i32) {
    %c0_i32 = arith.constant 0 : i32
    %c0_i32_0 = arith.constant 0 : i32
    %c0_i32_1 = arith.constant 0 : i32
    return %c0_i32, %c0_i32_0 : i32, i32
  }
  func.func @transform_4(%arg0: i32) -> (i32, i32) {
    %c0_i32 = arith.constant 0 : i32
    %c0_i32_0 = arith.constant 0 : i32
    %c0_i32_1 = arith.constant 0 : i32
    return %c0_i32, %c0_i32_0 : i32, i32
  }
  func.func @transform_5(%arg0: i32) -> (i32, i32) {
    %c0_i32 = arith.constant 0 : i32
    %c0_i32_0 = arith.constant 0 : i32
    %c0_i32_1 = arith.constant 0 : i32
    return %c0_i32, %c0_i32_0 : i32, i32
  }
  func.func @transform_6(%arg0: i32) -> (i32, i32) {
    %c0_i32 = arith.constant 0 : i32
    %c0_i32_0 = arith.constant 0 : i32
    %c0_i32_1 = arith.constant 0 : i32
    return %c0_i32, %c0_i32_0 : i32, i32
  }
  func.func @transform_7(%arg0: i32) -> (i32, i32) {
    %c0_i32 = arith.constant 0 : i32
    %c0_i32_0 = arith.constant 0 : i32
    %c0_i32_1 = arith.constant 0 : i32
    return %c0_i32, %c0_i32_0 : i32, i32
  }
  func.func @transform_8(%arg0: i32) -> (i32, i32) {
    %c0_i32 = arith.constant 0 : i32
    %c0_i32_0 = arith.constant 0 : i32
    %c0_i32_1 = arith.constant 0 : i32
    return %c0_i32, %c0_i32_0 : i32, i32
  }
  func.func @transform_9(%arg0: i32) -> (i32, i32) {
    %c0_i32 = arith.constant 0 : i32
    %c0_i32_0 = arith.constant 0 : i32
    return %arg0, %c0_i32 : i32, i32
  }
  func.func @transform_10(%arg0: i32) -> (i32, i32) {
    %c0_i32 = arith.constant 0 : i32
    %c0_i32_0 = arith.constant 0 : i32
    return %arg0, %c0_i32 : i32, i32
  }
}

</mosaic_0001>

<llo_original>
// kernel: policy_network_forward.1
$region0: #{policy_network_forward.1}
  #allocation0 [shape = 'u32[]', space=smem, size = 0x4, offset = 0x4, fixed_abs, tag = 'smem constant byte address 0x4 - core index']
  #allocation1 [shape = 'u32[144,128]{1,0:T(1,128)}', space=vmem, size = 0x12000, scoped, tag = 'internal scratch']
  %s0 = inlined_call_operand.vmem [shape: f32[8,8], index: 0, kind: input, shape index: {}]
  %s1 = inlined_call_operand.vmem [shape: f32[8,128], index: 1, kind: input, shape index: {}]
  %s2 = inlined_call_operand.vmem [shape: f32[1,128], index: 2, kind: input, shape index: {}]
  %s3 = inlined_call_operand.vmem [shape: f32[128,128], index: 3, kind: input, shape index: {}]
  %s4 = inlined_call_operand.vmem [shape: f32[1,128], index: 4, kind: input, shape index: {}]
  %s5 = inlined_call_operand.vmem [shape: f32[128,128], index: 5, kind: input, shape index: {}]
  %s6 = inlined_call_operand.vmem [shape: f32[1,128], index: 6, kind: input, shape index: {}]
  %s7 = inlined_call_operand.vmem [shape: f32[128,128], index: 7, kind: input, shape index: {}]
  %s8 = inlined_call_operand.vmem [shape: f32[1,128], index: 8, kind: input, shape index: {}]
  %s9 = inlined_call_operand.vmem [shape: f32[8,128], index: 9, kind: output, shape index: {0}]
  %s10 = inlined_call_operand.vmem [shape: f32[8,128], index: 10, kind: output, shape index: {1}]
  %11 = xla_tuple %s9, %s10
  %s12 = sld [smem:[#allocation0]]
  $region54: #{policy_network_forward.1} parent=0
    _
  %s14 = ssub.s32 1, %s12
  %s15 = scalar_select 0, %s14, %s12
  // Predicated region
  $region2: #{policy_network_forward.1} parent=0 // pred_check
    _
  $region3: #{policy_network_forward.1} parent=0 // pred_check_branch
    %17 = sbr.rel (0) target = $region5
  $region4: #{policy_network_forward.1} parent=0 // pred_region
    _
  $region5: #{policy_network_forward.1} parent=0 // pred_fallthru
    _
  // Predicated region
  $region6: #{policy_network_forward.1} parent=0 // pred_check
    _
  $region7: #{policy_network_forward.1} parent=0 // pred_check_branch
    %19 = sbr.rel (0) target = $region9
  $region8: #{policy_network_forward.1} parent=0 // pred_region
    _
  $region9: #{policy_network_forward.1} parent=0 // pred_fallthru
    _
  // Predicated region
  $region10: #{policy_network_forward.1} parent=0 // pred_check
    _
  $region11: #{policy_network_forward.1} parent=0 // pred_check_branch
    %21 = sbr.rel (0) target = $region13
  $region12: #{policy_network_forward.1} parent=0 // pred_region
    _
  $region13: #{policy_network_forward.1} parent=0 // pred_fallthru
    _
  // Predicated region
  $region14: #{policy_network_forward.1} parent=0 // pred_check
    _
  $region15: #{policy_network_forward.1} parent=0 // pred_check_branch
    %23 = sbr.rel (0) target = $region17
  $region16: #{policy_network_forward.1} parent=0 // pred_region
    _
  $region17: #{policy_network_forward.1} parent=0 // pred_fallthru
    _
  // Predicated region
  $region18: #{policy_network_forward.1} parent=0 // pred_check
    _
  $region19: #{policy_network_forward.1} parent=0 // pred_check_branch
    %25 = sbr.rel (0) target = $region21
  $region20: #{policy_network_forward.1} parent=0 // pred_region
    _
  $region21: #{policy_network_forward.1} parent=0 // pred_fallthru
    _
  // Predicated region
  $region22: #{policy_network_forward.1} parent=0 // pred_check
    _
  $region23: #{policy_network_forward.1} parent=0 // pred_check_branch
    %27 = sbr.rel (0) target = $region25
  $region24: #{policy_network_forward.1} parent=0 // pred_region
    _
  $region25: #{policy_network_forward.1} parent=0 // pred_fallthru
    _
  // Predicated region
  $region26: #{policy_network_forward.1} parent=0 // pred_check
    _
  $region27: #{policy_network_forward.1} parent=0 // pred_check_branch
    %29 = sbr.rel (0) target = $region29
  $region28: #{policy_network_forward.1} parent=0 // pred_region
    _
  $region29: #{policy_network_forward.1} parent=0 // pred_fallthru
    _
  // Predicated region
  $region30: #{policy_network_forward.1} parent=0 // pred_check
    _
  $region31: #{policy_network_forward.1} parent=0 // pred_check_branch
    %31 = sbr.rel (0) target = $region33
  $region32: #{policy_network_forward.1} parent=0 // pred_region
    _
  $region33: #{policy_network_forward.1} parent=0 // pred_fallthru
    _
  // Predicated region
  $region34: #{policy_network_forward.1} parent=0 // pred_check
    _
  $region35: #{policy_network_forward.1} parent=0 // pred_check_branch
    %33 = sbr.rel (0) target = $region37
  $region36: #{policy_network_forward.1} parent=0 // pred_region
    _
  $region37: #{policy_network_forward.1} parent=0 // pred_fallthru
    _
  %v34 = vld [vmem:[%s0] sm:$0xff]
  %v35 = vld [vmem:[%s1] sm:$0xff]
  %v36 = vld [vmem:[%s2] sm:$0x1]
  %v38 = vlaneseq
  %v39 = vshrl.u32 %v38, 7
  %v40 = vsub.s32 0, %v39
  %v41 = vrot.slane %v36, %v40
  %vm43 = vcmask 64512
  %v45 = vsel %vm43, %v34, 0
  %47 = vmatprep.subr.mxu0 0.0
  %48 = vmatpush1.msra.mxu0 0.0
  %49 = vmatprep.subr.mxu0 0.0
  %50 = vmatpush1.msra.mxu0 0.0
  %51 = vmatprep.subr.mxu0 0.0
  %52 = vmatpush1.msra.mxu0 0.0
  %53 = vmatprep.subr.mxu0 0.0
  %54 = vmatpush1.msra.mxu0 0.0
  %55 = vmatprep.subr.mxu0 0.0
  %56 = vmatpush1.msra.mxu0 0.0
  %57 = vmatprep.subr.mxu0 0.0
  %58 = vmatpush1.msra.mxu0 0.0
  %59 = vmatprep.subr.mxu0 0.0
  %60 = vmatpush1.msra.mxu0 0.0
  %61 = vmatprep.subr.mxu0 0.0
  %62 = vmatpush1.msra.mxu0 0.0
  %63 = vmatprep.subr.mxu0 0.0
  %64 = vmatpush1.msra.mxu0 0.0
  %65 = vmatprep.subr.mxu0 0.0
  %66 = vmatpush1.msra.mxu0 0.0
  %67 = vmatprep.subr.mxu0 0.0
  %68 = vmatpush1.msra.mxu0 0.0
  %69 = vmatprep.subr.mxu0 0.0
  %70 = vmatpush1.msra.mxu0 0.0
  %71 = vmatprep.subr.mxu0 0.0
  %72 = vmatpush1.msra.mxu0 0.0
  %73 = vmatprep.subr.mxu0 0.0
  %74 = vmatpush1.msra.mxu0 0.0
  %75 = vmatprep.subr.mxu0 0.0
  %76 = vmatpush1.msra.mxu0 0.0
  %77 = vmatprep.subr.mxu0 0.0
  %78 = vmatpush1.msra.mxu0 %v35
  %79 = vmatprep.subr.mxu0 0.0
  %80 = vmatpush2.msra.mxu0 0.0
  %81 = vmatprep.subr.mxu0 0.0
  %82 = vmatpush2.msra.mxu0 0.0
  %83 = vmatprep.subr.mxu0 0.0
  %84 = vmatpush2.msra.mxu0 0.0
  %85 = vmatprep.subr.mxu0 0.0
  %86 = vmatpush2.msra.mxu0 0.0
  %87 = vmatprep.subr.mxu0 0.0
  %88 = vmatpush2.msra.mxu0 0.0
  %89 = vmatprep.subr.mxu0 0.0
  %90 = vmatpush2.msra.mxu0 0.0
  %91 = vmatprep.subr.mxu0 0.0
  %92 = vmatpush2.msra.mxu0 0.0
  %93 = vmatprep.subr.mxu0 0.0
  %94 = vmatpush2.msra.mxu0 0.0
  %95 = vmatprep.subr.mxu0 0.0
  %96 = vmatpush2.msra.mxu0 0.0
  %97 = vmatprep.subr.mxu0 0.0
  %98 = vmatpush2.msra.mxu0 0.0
  %99 = vmatprep.subr.mxu0 0.0
  %100 = vmatpush2.msra.mxu0 0.0
  %101 = vmatprep.subr.mxu0 0.0
  %102 = vmatpush2.msra.mxu0 0.0
  %103 = vmatprep.subr.mxu0 0.0
  %104 = vmatpush2.msra.mxu0 0.0
  %105 = vmatprep.subr.mxu0 0.0
  %106 = vmatpush2.msra.mxu0 0.0
  %107 = vmatprep.subr.mxu0 0.0
  %108 = vmatpush2.msra.mxu0 0.0
  %109 = vmatprep.subr.mxu0 0.0
  %110 = vmatpush2.msra.mxu0 0.0
  %111 = vmatprep.mubr.f32.mxu0 0.0
  %112 = vmatmul.mubr.f32.gmra.mxu0 %v45
  %v113 = vpop.f32.mrf.mxu0
  %v114 = vadd.f32 %v41, %v113
  %v115 = vpop.f32.mrf.mxu0
  %116 = vdwg.mxu0
  %v117 = vmax.f32 %v114, 0.0
  %v118 = vld [vmem:[%s3] sm:$0xff]
  %v119 = vld [vmem:[%s3 + $0x8] sm:$0xff]
  %v120 = vld [vmem:[%s3 + $0x10] sm:$0xff]
  %v121 = vld [vmem:[%s3 + $0x18] sm:$0xff]
  %v122 = vld [vmem:[%s3 + $0x20] sm:$0xff]
  %v123 = vld [vmem:[%s3 + $0x28] sm:$0xff]
  %v124 = vld [vmem:[%s3 + $0x30] sm:$0xff]
  %v125 = vld [vmem:[%s3 + $0x38] sm:$0xff]
  %v126 = vld [vmem:[%s3 + $0x40] sm:$0xff]
  %v127 = vld [vmem:[%s3 + $0x48] sm:$0xff]
  %v128 = vld [vmem:[%s3 + $0x50] sm:$0xff]
  %v129 = vld [vmem:[%s3 + $0x58] sm:$0xff]
  %v130 = vld [vmem:[%s3 + $0x60] sm:$0xff]
  %v131 = vld [vmem:[%s3 + $0x68] sm:$0xff]
  %v132 = vld [vmem:[%s3 + $0x70] sm:$0xff]
  %v133 = vld [vmem:[%s3 + $0x78] sm:$0xff]
  %v134 = vld [vmem:[%s4] sm:$0x1]
  %v136 = vlaneseq
  %v137 = vshrl.u32 %v136, 7
  %v138 = vsub.s32 0, %v137
  %v139 = vrot.slane %v134, %v138
  %141 = vmatprep.subr.mxu0 0.0
  %142 = vmatpush1.msra.mxu0 %v133
  %143 = vmatprep.subr.mxu0 0.0
  %144 = vmatpush1.msra.mxu0 %v132
  %145 = vmatprep.subr.mxu0 0.0
  %146 = vmatpush1.msra.mxu0 %v131
  %147 = vmatprep.subr.mxu0 0.0
  %148 = vmatpush1.msra.mxu0 %v130
  %149 = vmatprep.subr.mxu0 0.0
  %150 = vmatpush1.msra.mxu0 %v129
  %151 = vmatprep.subr.mxu0 0.0
  %152 = vmatpush1.msra.mxu0 %v128
  %153 = vmatprep.subr.mxu0 0.0
  %154 = vmatpush1.msra.mxu0 %v127
  %155 = vmatprep.subr.mxu0 0.0
  %156 = vmatpush1.msra.mxu0 %v126
  %157 = vmatprep.subr.mxu0 0.0
  %158 = vmatpush1.msra.mxu0 %v125
  %159 = vmatprep.subr.mxu0 0.0
  %160 = vmatpush1.msra.mxu0 %v124
  %161 = vmatprep.subr.mxu0 0.0
  %162 = vmatpush1.msra.mxu0 %v123
  %163 = vmatprep.subr.mxu0 0.0
  %164 = vmatpush1.msra.mxu0 %v122
  %165 = vmatprep.subr.mxu0 0.0
  %166 = vmatpush1.msra.mxu0 %v121
  %167 = vmatprep.subr.mxu0 0.0
  %168 = vmatpush1.msra.mxu0 %v120
  %169 = vmatprep.subr.mxu0 0.0
  %170 = vmatpush1.msra.mxu0 %v119
  %171 = vmatprep.subr.mxu0 0.0
  %172 = vmatpush1.msra.mxu0 %v118
  %173 = vmatprep.subr.mxu0 0.0
  %174 = vmatpush2.msra.mxu0 0.0
  %175 = vmatprep.subr.mxu0 0.0
  %176 = vmatpush2.msra.mxu0 0.0
  %177 = vmatprep.subr.mxu0 0.0
  %178 = vmatpush2.msra.mxu0 0.0
  %179 = vmatprep.subr.mxu0 0.0
  %180 = vmatpush2.msra.mxu0 0.0
  %181 = vmatprep.subr.mxu0 0.0
  %182 = vmatpush2.msra.mxu0 0.0
  %183 = vmatprep.subr.mxu0 0.0
  %184 = vmatpush2.msra.mxu0 0.0
  %185 = vmatprep.subr.mxu0 0.0
  %186 = vmatpush2.msra.mxu0 0.0
  %187 = vmatprep.subr.mxu0 0.0
  %188 = vmatpush2.msra.mxu0 0.0
  %189 = vmatprep.subr.mxu0 0.0
  %190 = vmatpush2.msra.mxu0 0.0
  %191 = vmatprep.subr.mxu0 0.0
  %192 = vmatpush2.msra.mxu0 0.0
  %193 = vmatprep.subr.mxu0 0.0
  %194 = vmatpush2.msra.mxu0 0.0
  %195 = vmatprep.subr.mxu0 0.0
  %196 = vmatpush2.msra.mxu0 0.0
  %197 = vmatprep.subr.mxu0 0.0
  %198 = vmatpush2.msra.mxu0 0.0
  %199 = vmatprep.subr.mxu0 0.0
  %200 = vmatpush2.msra.mxu0 0.0
  %201 = vmatprep.subr.mxu0 0.0
  %202 = vmatpush2.msra.mxu0 0.0
  %203 = vmatprep.subr.mxu0 0.0
  %204 = vmatpush2.msra.mxu0 0.0
  %205 = vmatprep.mubr.f32.mxu0 0.0
  %206 = vmatmul.mubr.f32.gmra.mxu0 %v117
  %v207 = vpop.f32.mrf.mxu0
  %v208 = vadd.f32 %v139, %v207
  %v209 = vpop.f32.mrf.mxu0
  %210 = vdwg.mxu0
  %v211 = vmax.f32 %v208, 0.0
  %v212 = vld [vmem:[%s5] sm:$0xff]
  %v213 = vld [vmem:[%s5 + $0x8] sm:$0xff]
  %v214 = vld [vmem:[%s5 + $0x10] sm:$0xff]
  %v215 = vld [vmem:[%s5 + $0x18] sm:$0xff]
  %v216 = vld [vmem:[%s5 + $0x20] sm:$0xff]
  %v217 = vld [vmem:[%s5 + $0x28] sm:$0xff]
  %v218 = vld [vmem:[%s5 + $0x30] sm:$0xff]
  %v219 = vld [vmem:[%s5 + $0x38] sm:$0xff]
  %v220 = vld [vmem:[%s5 + $0x40] sm:$0xff]
  %v221 = vld [vmem:[%s5 + $0x48] sm:$0xff]
  %v222 = vld [vmem:[%s5 + $0x50] sm:$0xff]
  %v223 = vld [vmem:[%s5 + $0x58] sm:$0xff]
  %v224 = vld [vmem:[%s5 + $0x60] sm:$0xff]
  %v225 = vld [vmem:[%s5 + $0x68] sm:$0xff]
  %v226 = vld [vmem:[%s5 + $0x70] sm:$0xff]
  %v227 = vld [vmem:[%s5 + $0x78] sm:$0xff]
  %v228 = vld [vmem:[%s6] sm:$0x1]
  %v230 = vlaneseq
  %v231 = vshrl.u32 %v230, 7
  %v232 = vsub.s32 0, %v231
  %v233 = vrot.slane %v228, %v232
  %235 = vmatprep.subr.mxu0 0.0
  %236 = vmatpush1.msra.mxu0 %v227
  %237 = vmatprep.subr.mxu0 0.0
  %238 = vmatpush1.msra.mxu0 %v226
  %239 = vmatprep.subr.mxu0 0.0
  %240 = vmatpush1.msra.mxu0 %v225
  %241 = vmatprep.subr.mxu0 0.0
  %242 = vmatpush1.msra.mxu0 %v224
  %243 = vmatprep.subr.mxu0 0.0
  %244 = vmatpush1.msra.mxu0 %v223
  %245 = vmatprep.subr.mxu0 0.0
  %246 = vmatpush1.msra.mxu0 %v222
  %247 = vmatprep.subr.mxu0 0.0
  %248 = vmatpush1.msra.mxu0 %v221
  %249 = vmatprep.subr.mxu0 0.0
  %250 = vmatpush1.msra.mxu0 %v220
  %251 = vmatprep.subr.mxu0 0.0
  %252 = vmatpush1.msra.mxu0 %v219
  %253 = vmatprep.subr.mxu0 0.0
  %254 = vmatpush1.msra.mxu0 %v218
  %255 = vmatprep.subr.mxu0 0.0
  %256 = vmatpush1.msra.mxu0 %v217
  %257 = vmatprep.subr.mxu0 0.0
  %258 = vmatpush1.msra.mxu0 %v216
  %259 = vmatprep.subr.mxu0 0.0
  %260 = vmatpush1.msra.mxu0 %v215
  %261 = vmatprep.subr.mxu0 0.0
  %262 = vmatpush1.msra.mxu0 %v214
  %263 = vmatprep.subr.mxu0 0.0
  %264 = vmatpush1.msra.mxu0 %v213
  %265 = vmatprep.subr.mxu0 0.0
  %266 = vmatpush1.msra.mxu0 %v212
  %267 = vmatprep.subr.mxu0 0.0
  %268 = vmatpush2.msra.mxu0 0.0
  %269 = vmatprep.subr.mxu0 0.0
  %270 = vmatpush2.msra.mxu0 0.0
  %271 = vmatprep.subr.mxu0 0.0
  %272 = vmatpush2.msra.mxu0 0.0
  %273 = vmatprep.subr.mxu0 0.0
  %274 = vmatpush2.msra.mxu0 0.0
  %275 = vmatprep.subr.mxu0 0.0
  %276 = vmatpush2.msra.mxu0 0.0
  %277 = vmatprep.subr.mxu0 0.0
  %278 = vmatpush2.msra.mxu0 0.0
  %279 = vmatprep.subr.mxu0 0.0
  %280 = vmatpush2.msra.mxu0 0.0
  %281 = vmatprep.subr.mxu0 0.0
  %282 = vmatpush2.msra.mxu0 0.0
  %283 = vmatprep.subr.mxu0 0.0
  %284 = vmatpush2.msra.mxu0 0.0
  %285 = vmatprep.subr.mxu0 0.0
  %286 = vmatpush2.msra.mxu0 0.0
  %287 = vmatprep.subr.mxu0 0.0
  %288 = vmatpush2.msra.mxu0 0.0
  %289 = vmatprep.subr.mxu0 0.0
  %290 = vmatpush2.msra.mxu0 0.0
  %291 = vmatprep.subr.mxu0 0.0
  %292 = vmatpush2.msra.mxu0 0.0
  %293 = vmatprep.subr.mxu0 0.0
  %294 = vmatpush2.msra.mxu0 0.0
  %295 = vmatprep.subr.mxu0 0.0
  %296 = vmatpush2.msra.mxu0 0.0
  %297 = vmatprep.subr.mxu0 0.0
  %298 = vmatpush2.msra.mxu0 0.0
  %299 = vmatprep.mubr.f32.mxu0 0.0
  %300 = vmatmul.mubr.f32.gmra.mxu0 %v211
  %v301 = vpop.f32.mrf.mxu0
  %v302 = vadd.f32 %v233, %v301
  %v303 = vpop.f32.mrf.mxu0
  %304 = vdwg.mxu0
  %v305 = vmax.f32 %v302, 0.0
  %v306 = vld [vmem:[%s7] sm:$0xff]
  %v307 = vld [vmem:[%s7 + $0x8] sm:$0xff]
  %v308 = vld [vmem:[%s7 + $0x10] sm:$0xff]
  %v309 = vld [vmem:[%s7 + $0x18] sm:$0xff]
  %v310 = vld [vmem:[%s7 + $0x20] sm:$0xff]
  %v311 = vld [vmem:[%s7 + $0x28] sm:$0xff]
  %v312 = vld [vmem:[%s7 + $0x30] sm:$0xff]
  %v313 = vld [vmem:[%s7 + $0x38] sm:$0xff]
  %v314 = vld [vmem:[%s7 + $0x40] sm:$0xff]
  %v315 = vld [vmem:[%s7 + $0x48] sm:$0xff]
  %v316 = vld [vmem:[%s7 + $0x50] sm:$0xff]
  %v317 = vld [vmem:[%s7 + $0x58] sm:$0xff]
  %v318 = vld [vmem:[%s7 + $0x60] sm:$0xff]
  %v319 = vld [vmem:[%s7 + $0x68] sm:$0xff]
  %v320 = vld [vmem:[%s7 + $0x70] sm:$0xff]
  %v321 = vld [vmem:[%s7 + $0x78] sm:$0xff]
  %v322 = vld [vmem:[%s8] sm:$0x1]
  %v324 = vlaneseq
  %v325 = vshrl.u32 %v324, 7
  %v326 = vsub.s32 0, %v325
  %v327 = vrot.slane %v322, %v326
  %329 = vmatprep.subr.mxu0 0.0
  %330 = vmatpush1.msra.mxu0 %v321
  %331 = vmatprep.subr.mxu0 0.0
  %332 = vmatpush1.msra.mxu0 %v320
  %333 = vmatprep.subr.mxu0 0.0
  %334 = vmatpush1.msra.mxu0 %v319
  %335 = vmatprep.subr.mxu0 0.0
  %336 = vmatpush1.msra.mxu0 %v318
  %337 = vmatprep.subr.mxu0 0.0
  %338 = vmatpush1.msra.mxu0 %v317
  %339 = vmatprep.subr.mxu0 0.0
  %340 = vmatpush1.msra.mxu0 %v316
  %341 = vmatprep.subr.mxu0 0.0
  %342 = vmatpush1.msra.mxu0 %v315
  %343 = vmatprep.subr.mxu0 0.0
  %344 = vmatpush1.msra.mxu0 %v314
  %345 = vmatprep.subr.mxu0 0.0
  %346 = vmatpush1.msra.mxu0 %v313
  %347 = vmatprep.subr.mxu0 0.0
  %348 = vmatpush1.msra.mxu0 %v312
  %349 = vmatprep.subr.mxu0 0.0
  %350 = vmatpush1.msra.mxu0 %v311
  %351 = vmatprep.subr.mxu0 0.0
  %352 = vmatpush1.msra.mxu0 %v310
  %353 = vmatprep.subr.mxu0 0.0
  %354 = vmatpush1.msra.mxu0 %v309
  %355 = vmatprep.subr.mxu0 0.0
  %356 = vmatpush1.msra.mxu0 %v308
  %357 = vmatprep.subr.mxu0 0.0
  %358 = vmatpush1.msra.mxu0 %v307
  %359 = vmatprep.subr.mxu0 0.0
  %360 = vmatpush1.msra.mxu0 %v306
  %361 = vmatprep.subr.mxu0 0.0
  %362 = vmatpush2.msra.mxu0 0.0
  %363 = vmatprep.subr.mxu0 0.0
  %364 = vmatpush2.msra.mxu0 0.0
  %365 = vmatprep.subr.mxu0 0.0
  %366 = vmatpush2.msra.mxu0 0.0
  %367 = vmatprep.subr.mxu0 0.0
  %368 = vmatpush2.msra.mxu0 0.0
  %369 = vmatprep.subr.mxu0 0.0
  %370 = vmatpush2.msra.mxu0 0.0
  %371 = vmatprep.subr.mxu0 0.0
  %372 = vmatpush2.msra.mxu0 0.0
  %373 = vmatprep.subr.mxu0 0.0
  %374 = vmatpush2.msra.mxu0 0.0
  %375 = vmatprep.subr.mxu0 0.0
  %376 = vmatpush2.msra.mxu0 0.0
  %377 = vmatprep.subr.mxu0 0.0
  %378 = vmatpush2.msra.mxu0 0.0
  %379 = vmatprep.subr.mxu0 0.0
  %380 = vmatpush2.msra.mxu0 0.0
  %381 = vmatprep.subr.mxu0 0.0
  %382 = vmatpush2.msra.mxu0 0.0
  %383 = vmatprep.subr.mxu0 0.0
  %384 = vmatpush2.msra.mxu0 0.0
  %385 = vmatprep.subr.mxu0 0.0
  %386 = vmatpush2.msra.mxu0 0.0
  %387 = vmatprep.subr.mxu0 0.0
  %388 = vmatpush2.msra.mxu0 0.0
  %389 = vmatprep.subr.mxu0 0.0
  %390 = vmatpush2.msra.mxu0 0.0
  %391 = vmatprep.subr.mxu0 0.0
  %392 = vmatpush2.msra.mxu0 0.0
  %393 = vmatprep.mubr.f32.mxu0 0.0
  %394 = vmatmul.mubr.f32.gmra.mxu0 %v305
  %v395 = vpop.f32.mrf.mxu0
  %v396 = vadd.f32 %v327, %v395
  %v397 = vpop.f32.mrf.mxu0
  %398 = vdwg.mxu0
  %399 = vst [vmem:[%s9] sm:$0xff] %v396
  %v400 = vlaneseq
  %v401 = vand.u32 %v400, 127
  %vm402 = vcmp.lt.s32.totalorder %v401, 4
  %v403 = vsel %vm402, %v396, -1e+30
  %404 = vmax.xlane.f32.xlu0 %v403
  %v405 = vpop.xlane.xlu0 %404
  %v406 = vsub.f32 %v403, %v405
  %v407 = vmul.f32 %v406, 1.442695
  %v408 = vpow.pop %v407
  %409 = vadd.xlane.f32.xlu0 %v408
  %v410 = vpop.xlane.xlu0 %409
  %v411 = vrcp.pop %v410
  %v412 = vmul.f32 %v408, %v411
  %413 = vst [vmem:[%s10] sm:$0xff] %v412
  // Predicated region
  $region38: #{policy_network_forward.1} parent=0 // pred_check
    _
  $region39: #{policy_network_forward.1} parent=0 // pred_check_branch
    %415 = sbr.rel (0) target = $region41
  $region40: #{policy_network_forward.1} parent=0 // pred_region
    _
  $region41: #{policy_network_forward.1} parent=0 // pred_fallthru
    _
  // Predicated region
  $region42: #{policy_network_forward.1} parent=0 // pred_check
    _
  $region43: #{policy_network_forward.1} parent=0 // pred_check_branch
    %417 = sbr.rel (0) target = $region45
  $region44: #{policy_network_forward.1} parent=0 // pred_region
    _
  $region45: #{policy_network_forward.1} parent=0 // pred_fallthru
    _
  // Predicated region
  $region46: #{policy_network_forward.1} parent=0 // pred_check
    _
  $region47: #{policy_network_forward.1} parent=0 // pred_check_branch
    %419 = sbr.rel (0) target = $region49
  $region48: #{policy_network_forward.1} parent=0 // pred_region
    _
  $region49: #{policy_network_forward.1} parent=0 // pred_fallthru
    _
  // Predicated region
  $region50: #{policy_network_forward.1} parent=0 // pred_check
    _
  $region51: #{policy_network_forward.1} parent=0 // pred_check_branch
    %421 = sbr.rel (0) target = $region53
  $region52: #{policy_network_forward.1} parent=0 // pred_region
    _
  $region53: #{policy_network_forward.1} parent=0 // pred_fallthru
    _

</llo_original>
